<compile_context>
chip_gen: v5e
topology: v5e:2x2
jax: 0.10.0
libtpu: 0.0.40
codegen_flags: <defaults>
</compile_context>

<pallas_src>
import functools

import jax
import jax.numpy as jnp
from jax.experimental import pallas as pl
from jax.experimental.pallas import tpu as pltpu


def _round_up(x: int, m: int) -> int:
    return ((x + m - 1) // m) * m


def _fc_block_kernel(x_ref, w_ref, b_ref, *rest, apply_dropout, drop_threshold,
                     inv_keep):
    # x_ref: (tm, tk)   w_ref: (tn, tk)   b_ref: (1, tn)
    # optional bits_ref: (tm, tn) uint32, then o_ref (tm, tn), acc_ref (tm, tn) f32
    if apply_dropout:
        bits_ref, o_ref, acc_ref = rest
    else:
        o_ref, acc_ref = rest

    k = pl.program_id(2)
    nk = pl.num_programs(2)

    @pl.when(k == 0)
    def _():
        acc_ref[...] = jnp.zeros_like(acc_ref)

    # x (tm, tk) . w (tn, tk) contracted on K -> (tm, tn); MXU, f32 accumulate.
    acc_ref[...] += jax.lax.dot_general(
        x_ref[...], w_ref[...],
        dimension_numbers=(((1,), (1,)), ((), ())),
        preferred_element_type=jnp.float32)

    @pl.when(k == nk - 1)
    def _():
        y = acc_ref[...] + b_ref[...].astype(jnp.float32)
        if apply_dropout:
            keep = bits_ref[...] >= jnp.uint32(drop_threshold)
            y = jnp.where(keep, y * jnp.float32(inv_keep), jnp.float32(0.0))
        o_ref[...] = jnp.maximum(y, 0.0).astype(o_ref.dtype)


def fc_block(x, weight, bias, *, p, training, key=None,
             compute_dtype=jnp.float32):
    """FCBlock forward: ReLU(Dropout(x @ W^T + b)).

    x:      (B, in_features)               float32
    weight: (out_features, in_features)    float32 (PyTorch nn.Linear layout)
    bias:   (out_features,)                float32
    p:      dropout probability (training mode only)
    key:    jax PRNG key for dropout randomness (required if training & p>0)
    """
    M, K = x.shape
    N, K_w = weight.shape
    assert K == K_w, "weight / input feature mismatch"

    apply_dropout = bool(training) and float(p) > 0.0
    if apply_dropout:
        assert 0.0 < float(p) < 1.0, "training-mode dropout requires 0 < p < 1"
        assert key is not None, "need a PRNG key for training-mode dropout"

    # ---- tile sizes (MXU-friendly, lane-dense output, fit v7x 64 MiB VMEM) ---
    tm = min(256, _round_up(M, 8))
    tn = min(256, _round_up(N, 128))
    tk = min(512, _round_up(K, 128))

    Mp, Np, Kp = _round_up(M, tm), _round_up(N, tn), _round_up(K, tk)

    # ---- pad operands (zeros in padded K keep the matmul exact) -------------
    xc = x.astype(compute_dtype)
    wc = weight.astype(compute_dtype)
    x_p = jnp.pad(xc, ((0, Mp - M), (0, Kp - K)))
    w_p = jnp.pad(wc, ((0, Np - N), (0, Kp - K)))
    b_p = jnp.pad(bias.astype(jnp.float32), (0, Np - N)).reshape(1, Np)

    grid = (Mp // tm, Np // tn, Kp // tk)

    in_specs = [
        pl.BlockSpec((tm, tk), lambda i, j, k: (i, k)),   # x tile
        pl.BlockSpec((tn, tk), lambda i, j, k: (j, k)),   # weight tile (N, K)
        pl.BlockSpec((1, tn), lambda i, j, k: (0, j)),    # bias row
    ]
    operands = [x_p, w_p, b_p]

    drop_threshold = 0
    inv_keep = 1.0
    if apply_dropout:
        # per-element uint32 bits; keep iff bits >= p * 2^32  (keep prob 1-p)
        bits = jax.random.bits(key, (Mp, Np), dtype=jnp.uint32)
        drop_threshold = int(float(p) * (2 ** 32))
        inv_keep = 1.0 / (1.0 - float(p))
        in_specs.append(pl.BlockSpec((tm, tn), lambda i, j, k: (i, j)))
        operands.append(bits)

    # ---- VMEM budget & cost estimate ----------------------------------------
    elt = jnp.dtype(compute_dtype).itemsize
    tile_bytes = (2 * (tm * tk + tn * tk) * elt          # double-buffered x, w
                  + 2 * tm * tn * 4                      # double-buffered out
                  + tm * tn * 4                          # accumulator
                  + 2 * tn * 4)                          # bias
    if apply_dropout:
        tile_bytes += 2 * tm * tn * 4
    vmem_limit = int(min(max(2 * tile_bytes, 8 * 1024 * 1024),
                         100 * 1024 * 1024))

    cost = pl.CostEstimate(
        flops=2 * M * K * N,
        transcendentals=0,
        bytes_accessed=elt * (M * K + N * K) + 4 * (M * N + N),
    )

    kernel = functools.partial(
        _fc_block_kernel,
        apply_dropout=apply_dropout,
        drop_threshold=drop_threshold,
        inv_keep=inv_keep,
    )

    out_p = pl.pallas_call(
        kernel,
        out_shape=jax.ShapeDtypeStruct((Mp, Np), jnp.float32),
        grid=grid,
        in_specs=in_specs,
        out_specs=pl.BlockSpec((tm, tn), lambda i, j, k: (i, j)),
        scratch_shapes=[pltpu.VMEM((tm, tn), jnp.float32)],
        compiler_params=pltpu.CompilerParams(
            dimension_semantics=("parallel", "parallel", "arbitrary"),
            vmem_limit_bytes=vmem_limit,
        ),
        cost_estimate=cost,
    )(*operands)

    return out_p[:M, :N]


if __name__ == "__main__":
    # Small shapes consistent with an AlexNet-style FC block.
    B, in_features, out_features = 8, 256, 128
    p = 0.5

    root = jax.random.PRNGKey(0)
    kx, kw, kb, kdrop = jax.random.split(root, 4)

    bound = 1.0 / (in_features ** 0.5)
    x = jax.random.normal(kx, (B, in_features), dtype=jnp.float32)
    weight = jax.random.uniform(kw, (out_features, in_features),
                                minval=-bound, maxval=bound, dtype=jnp.float32)
    bias = jax.random.uniform(kb, (out_features,),
                              minval=-bound, maxval=bound, dtype=jnp.float32)

    lin = x @ weight.T + bias

    # Eval mode: dropout is identity -> compare against pure-JAX reference.
    out_eval = jax.block_until_ready(
        fc_block(x, weight, bias, p=p, training=False))
    ref_eval = jnp.maximum(lin, 0.0)
    assert out_eval.shape == (B, out_features)
    assert jnp.allclose(out_eval, ref_eval, atol=1e-5, rtol=1e-5), "eval mismatch"

    # Training mode: dropout active. Every output is either 0 (dropped, or
    # negative pre-activation) or exactly (1/(1-p)) * linear output (kept).
    out_train = jax.block_until_ready(
        fc_block(x, weight, bias, p=p, training=True, key=kdrop))
    assert out_train.shape == (B, out_features)
    assert bool(jnp.all(out_train >= 0.0))
    scaled = lin / (1.0 - p)
    ok = jnp.isclose(out_train, 0.0, atol=1e-6) | jnp.isclose(
        out_train, scaled, atol=1e-4, rtol=1e-4)
    assert bool(jnp.all(ok)), "training-mode dropout values inconsistent"

    print("KERNEL_OK")
</pallas_src>

<mosaic_0001>
module attributes {stable_mosaic.version = 11 : i64} {
  func.func @_fc_block_kernel(%arg0: i32, %arg1: i32, %arg2: i32, %arg3: memref<8x256xf32, #tpu.memory_space<vmem>>, %arg4: memref<128x256xf32, #tpu.memory_space<vmem>>, %arg5: memref<1x128xf32, #tpu.memory_space<vmem>>, %arg6: memref<8x128xf32, #tpu.memory_space<vmem>>, %arg7: memref<8x128xf32, #tpu.memory_space<vmem>>) attributes {dimension_semantics = [#tpu.dimension_semantics<parallel>, #tpu.dimension_semantics<parallel>, #tpu.dimension_semantics<arbitrary>], iteration_bounds = array<i64: 1, 1, 1>, scalar_prefetch = 0 : i64, scratch_operands = 1 : i64, tpu.core_type = #tpu.core_type<tc>, window_params = [{transform_indices = @transform_0, window_bounds = array<i64: 8, 256>}, {transform_indices = @transform_1, window_bounds = array<i64: 128, 256>}, {transform_indices = @transform_2, window_bounds = array<i64: 1, 128>}, {transform_indices = @transform_3, window_bounds = array<i64: 8, 128>}]} {
    %c0_i32 = arith.constant 0 : i32
    %0 = arith.cmpi eq, %arg2, %c0_i32 : i32
    %1 = arith.extui %0 : i1 to i32
    %c0_i32_0 = arith.constant 0 : i32
    %2 = arith.cmpi ne, %1, %c0_i32_0 : i32
    scf.if %2 {
      %cst_10 = arith.constant 0.000000e+00 : f32
      %12 = vector.broadcast %cst_10 : f32 to vector<8x128xf32>
      %c0_11 = arith.constant 0 : index
      %c0_12 = arith.constant 0 : index
      %13 = vector.load %arg7[%c0_11, %c0_12] : memref<8x128xf32, #tpu.memory_space<vmem>>, vector<8x128xf32>
      tpu.vector_store %arg7[%c0_11, %c0_12], %12 {strides = array<i32>} : memref<8x128xf32, #tpu.memory_space<vmem>>, vector<8x128xf32>,
    } else {
    }
    %c0 = arith.constant 0 : index
    %c0_1 = arith.constant 0 : index
    %3 = vector.load %arg7[%c0, %c0_1] : memref<8x128xf32, #tpu.memory_space<vmem>>, vector<8x128xf32>
    %c0_2 = arith.constant 0 : index
    %c0_3 = arith.constant 0 : index
    %4 = vector.load %arg3[%c0_2, %c0_3] : memref<8x256xf32, #tpu.memory_space<vmem>>, vector<8x256xf32>
    %c0_4 = arith.constant 0 : index
    %c0_5 = arith.constant 0 : index
    %5 = vector.load %arg4[%c0_4, %c0_5] : memref<128x256xf32, #tpu.memory_space<vmem>>, vector<128x256xf32>
    %cst = arith.constant dense<0.000000e+00> : vector<8x128xf32>
    %6 = tpu.matmul %4, %5, %cst {dimension_numbers = #tpu.dot_dimension_numbers<[1], [1], [0], [0], [0, 0, 1, 0], [], []>} : vector<8x256xf32>, vector<128x256xf32>, vector<8x128xf32> -> vector<8x128xf32>
    %7 = arith.addf %3, %6 : vector<8x128xf32>
    %c0_6 = arith.constant 0 : index
    %c0_7 = arith.constant 0 : index
    %8 = vector.load %arg7[%c0_6, %c0_7] : memref<8x128xf32, #tpu.memory_space<vmem>>, vector<8x128xf32>
    tpu.vector_store %arg7[%c0_6, %c0_7], %7 {strides = array<i32>} : memref<8x128xf32, #tpu.memory_space<vmem>>, vector<8x128xf32>,
    %c0_i32_8 = arith.constant 0 : i32
    %9 = arith.cmpi eq, %arg2, %c0_i32_8 : i32
    %10 = arith.extui %9 : i1 to i32
    %c0_i32_9 = arith.constant 0 : i32
    %11 = arith.cmpi ne, %10, %c0_i32_9 : i32
    scf.if %11 {
      %c0_10 = arith.constant 0 : index
      %c0_11 = arith.constant 0 : index
      %12 = vector.load %arg7[%c0_10, %c0_11] : memref<8x128xf32, #tpu.memory_space<vmem>>, vector<8x128xf32>
      %c0_12 = arith.constant 0 : index
      %c0_13 = arith.constant 0 : index
      %13 = vector.load %arg5[%c0_12, %c0_13] : memref<1x128xf32, #tpu.memory_space<vmem>>, vector<1x128xf32>
      %14 = vector.broadcast %13 : vector<1x128xf32> to vector<8x128xf32>
      %15 = arith.addf %12, %14 : vector<8x128xf32>
      %cst_14 = arith.constant 0.000000e+00 : f32
      %16 = vector.broadcast %cst_14 : f32 to vector<8x128xf32>
      %17 = arith.maximumf %15, %16 : vector<8x128xf32>
      %c0_15 = arith.constant 0 : index
      %c0_16 = arith.constant 0 : index
      %18 = vector.load %arg6[%c0_15, %c0_16] : memref<8x128xf32, #tpu.memory_space<vmem>>, vector<8x128xf32>
      tpu.vector_store %arg6[%c0_15, %c0_16], %17 {strides = array<i32>} : memref<8x128xf32, #tpu.memory_space<vmem>>, vector<8x128xf32>,
    } else {
    }
    return
  }
  func.func @transform_0(%arg0: i32, %arg1: i32, %arg2: i32) -> (i32, i32) {
    %c0_i32 = arith.constant 0 : i32
    return %arg0, %arg2 : i32, i32
  }
  func.func @transform_1(%arg0: i32, %arg1: i32, %arg2: i32) -> (i32, i32) {
    %c0_i32 = arith.constant 0 : i32
    return %arg1, %arg2 : i32, i32
  }
  func.func @transform_2(%arg0: i32, %arg1: i32, %arg2: i32) -> (i32, i32) {
    %c0_i32 = arith.constant 0 : i32
    %c0_i32_0 = arith.constant 0 : i32
    return %c0_i32, %arg1 : i32, i32
  }
  func.func @transform_3(%arg0: i32, %arg1: i32, %arg2: i32) -> (i32, i32) {
    %c0_i32 = arith.constant 0 : i32
    return %arg0, %arg1 : i32, i32
  }
}

</mosaic_0001>

<llo_original>
// kernel: tpu_custom_call.1
$region0: #{tpu_custom_call.1}
  #allocation0 [shape = 'u32[]', space=smem, size = 0x4, offset = 0x4, fixed_abs, tag = 'smem constant byte address 0x4 - core index']
  #allocation1 [shape = 'u32[72,128]{1,0:T(1,128)}', space=vmem, size = 0x9000, scoped, tag = 'internal scratch']
  #allocation2 [shape = 'f32[8,128]{1,0:T(8,128)}', space=vmem, size = 0x1000, scoped, tag = 'scratch operand']
  %s0 = inlined_call_operand.hbm [shape: f32[8,256], index: 0, kind: input, shape index: {}]
  %s1 = inlined_call_operand.hbm [shape: f32[128,256], index: 1, kind: input, shape index: {}]
  %s2 = inlined_call_operand.vmem [shape: f32[1,128], index: 2, kind: input, shape index: {}]
  %s3 = inlined_call_operand.hbm [shape: f32[8,128], index: 3, kind: output, shape index: {}]
  %s4 = sld [smem:[#allocation0]]
  $region38: #{tpu_custom_call.1} parent=0
    _
  %s6 = ssub.s32 1, %s4
  %s7 = scalar_select 0, %s6, %s4
  $region1: #{tpu_custom_call.1} parent=0
    #allocation3 [shape = 'u8[8192]{0}', space=vmem, size = 0x2000, scoped, tag = 'input window, operand 0, single buffered']
    #allocation4 [shape = 's32[1]{0}', space=sflag, size = 0x4, scoped, tag = 'scoped memory for tpu_custom_call.1']
    #allocation5 [shape = 's32[1]{0}', space=sflag, size = 0x4, scoped, tag = 'scoped memory for tpu_custom_call.1']
    #allocation6 [shape = 'u8[131072]{0}', space=vmem, size = 0x20000, scoped, tag = 'input window, operand 1, single buffered']
    #allocation7 [shape = 's32[1]{0}', space=sflag, size = 0x4, scoped, tag = 'scoped memory for tpu_custom_call.1']
    #allocation8 [shape = 'u8[4096]{0}', space=vmem, size = 0x1000, scoped, tag = 'output window, operand 0, single buffered']
    %8 = vsyncpa [#allocation4], 0
    %9 = vsyncpa [#allocation7], 0
    %10 = vsyncpa [#allocation5], 0
    // Predicated region
    $region2: #{tpu_custom_call.1} parent=1 // pred_check
      _
    $region3: #{tpu_custom_call.1} parent=1 // pred_check_branch
      %12 = sbr.rel (0) target = $region5
    $region4: #{tpu_custom_call.1} parent=1 // pred_region
      %14 = vsyncadd [#allocation4], 0
      %s16 = sshll.u32 %s0, 4
      %s17 = int_to_ptr.hbm [resolvable:$true] %s16
      %s18 = sshll.u32 [#allocation3], 4
      %s19 = int_to_ptr.vmem [resolvable:$true] %s18
      %21 = dma.hbm_to_vmem [thread:$0]  %s17, 256, %s19, [#allocation4]
    $region5: #{tpu_custom_call.1} parent=1 // pred_fallthru
      _
    // Predicated region
    $region6: #{tpu_custom_call.1} parent=1 // pred_check
      _
    $region7: #{tpu_custom_call.1} parent=1 // pred_check_branch
      %23 = sbr.rel (0) target = $region9
    $region8: #{tpu_custom_call.1} parent=1 // pred_region
      %25 = vsyncadd [#allocation7], 0
      %s26 = sshll.u32 %s1, 4
      %s27 = int_to_ptr.hbm [resolvable:$true] %s26
      %s28 = sshll.u32 [#allocation6], 4
      %s29 = int_to_ptr.vmem [resolvable:$true] %s28
      %34 = dma.hbm_to_vmem [thread:$0]  %s27, 4096, %s29, [#allocation7], 256, 256, 16
    $region9: #{tpu_custom_call.1} parent=1 // pred_fallthru
      _
    // Predicated region
    $region10: #{tpu_custom_call.1} parent=1 // pred_check
      _
    $region11: #{tpu_custom_call.1} parent=1 // pred_check_branch
      %36 = sbr.rel (0) target = $region13
    $region12: #{tpu_custom_call.1} parent=1 // pred_region
      _
    $region13: #{tpu_custom_call.1} parent=1 // pred_fallthru
      _
    // Predicated region
    $region14: #{tpu_custom_call.1} parent=1 // pred_check
      _
    $region15: #{tpu_custom_call.1} parent=1 // pred_check_branch
      %38 = sbr.rel (0) target = $region17
    $region16: #{tpu_custom_call.1} parent=1 // pred_region
      %40 = dma.done [#allocation4], 256
    $region17: #{tpu_custom_call.1} parent=1 // pred_fallthru
      _
    // Predicated region
    $region18: #{tpu_custom_call.1} parent=1 // pred_check
      _
    $region19: #{tpu_custom_call.1} parent=1 // pred_check_branch
      %42 = sbr.rel (0) target = $region21
    $region20: #{tpu_custom_call.1} parent=1 // pred_region
      %44 = dma.done [#allocation7], 4096
    $region21: #{tpu_custom_call.1} parent=1 // pred_fallthru
      _
    %p45 = scmp.eq.s32.totalorder 0, 0
    // Predicated region
    $region22: #{tpu_custom_call.1} parent=1 // pred_check
      %p46 = pneg %p45
    $region23: #{tpu_custom_call.1} parent=1 // pred_check_branch
      %48 = sbr.rel (%p46) target = $region25
    $region24: #{tpu_custom_call.1} parent=1 // pred_region
      %49 = vst [vmem:[#allocation2] sm:$0xff] 0.0
    $region25: #{tpu_custom_call.1} parent=1 // pred_fallthru
      _
    %v50 = vld [vmem:[#allocation2] sm:$0xff]
    %v51 = vld [vmem:[#allocation3] sm:$0xff]
    %v52 = vld [vmem:[#allocation3 + $0x8] sm:$0xff]
    %v53 = vld [vmem:[#allocation6] sm:$0xff]
    %v54 = vld [vmem:[#allocation6 + $0x8] sm:$0xff]
    %v55 = vld [vmem:[#allocation6 + $0x10] sm:$0xff]
    %v56 = vld [vmem:[#allocation6 + $0x18] sm:$0xff]
    %v57 = vld [vmem:[#allocation6 + $0x20] sm:$0xff]
    %v58 = vld [vmem:[#allocation6 + $0x28] sm:$0xff]
    %v59 = vld [vmem:[#allocation6 + $0x30] sm:$0xff]
    %v60 = vld [vmem:[#allocation6 + $0x38] sm:$0xff]
    %v61 = vld [vmem:[#allocation6 + $0x40] sm:$0xff]
    %v62 = vld [vmem:[#allocation6 + $0x48] sm:$0xff]
    %v63 = vld [vmem:[#allocation6 + $0x50] sm:$0xff]
    %v64 = vld [vmem:[#allocation6 + $0x58] sm:$0xff]
    %v65 = vld [vmem:[#allocation6 + $0x60] sm:$0xff]
    %v66 = vld [vmem:[#allocation6 + $0x68] sm:$0xff]
    %v67 = vld [vmem:[#allocation6 + $0x70] sm:$0xff]
    %v68 = vld [vmem:[#allocation6 + $0x78] sm:$0xff]
    %v69 = vld [vmem:[#allocation6 + $0x80] sm:$0xff]
    %v70 = vld [vmem:[#allocation6 + $0x88] sm:$0xff]
    %v71 = vld [vmem:[#allocation6 + $0x90] sm:$0xff]
    %v72 = vld [vmem:[#allocation6 + $0x98] sm:$0xff]
    %v73 = vld [vmem:[#allocation6 + $0xa0] sm:$0xff]
    %v74 = vld [vmem:[#allocation6 + $0xa8] sm:$0xff]
    %v75 = vld [vmem:[#allocation6 + $0xb0] sm:$0xff]
    %v76 = vld [vmem:[#allocation6 + $0xb8] sm:$0xff]
    %v77 = vld [vmem:[#allocation6 + $0xc0] sm:$0xff]
    %v78 = vld [vmem:[#allocation6 + $0xc8] sm:$0xff]
    %v79 = vld [vmem:[#allocation6 + $0xd0] sm:$0xff]
    %v80 = vld [vmem:[#allocation6 + $0xd8] sm:$0xff]
    %v81 = vld [vmem:[#allocation6 + $0xe0] sm:$0xff]
    %v82 = vld [vmem:[#allocation6 + $0xe8] sm:$0xff]
    %v83 = vld [vmem:[#allocation6 + $0xf0] sm:$0xff]
    %v84 = vld [vmem:[#allocation6 + $0xf8] sm:$0xff]
    %85 = vmatpush.xpose.msra.mxu0 %v83
    %86 = vmatpush.xpose.msra.mxu0 %v81
    %87 = vmatpush.xpose.msra.mxu0 %v79
    %88 = vmatpush.xpose.msra.mxu0 %v77
    %89 = vmatpush.xpose.msra.mxu0 %v75
    %90 = vmatpush.xpose.msra.mxu0 %v73
    %91 = vmatpush.xpose.msra.mxu0 %v71
    %92 = vmatpush.xpose.msra.mxu0 %v69
    %93 = vmatpush.xpose.msra.mxu0 %v67
    %94 = vmatpush.xpose.msra.mxu0 %v65
    %95 = vmatpush.xpose.msra.mxu0 %v63
    %96 = vmatpush.xpose.msra.mxu0 %v61
    %97 = vmatpush.xpose.msra.mxu0 %v59
    %98 = vmatpush.xpose.msra.mxu0 %v57
    %99 = vmatpush.xpose.msra.mxu0 %v55
    %100 = vmatpush.xpose.msra.mxu0 %v53
    %101 = vmatmul.f32.gmra.mxu0 %v51
    %v102 = vpop.f32.mrf.mxu0
    %v103 = vadd.f32 0.0, %v102
    %104 = vdwg.mxu0
    %105 = vmatpush.xpose.msra.mxu0 %v84
    %106 = vmatpush.xpose.msra.mxu0 %v82
    %107 = vmatpush.xpose.msra.mxu0 %v80
    %108 = vmatpush.xpose.msra.mxu0 %v78
    %109 = vmatpush.xpose.msra.mxu0 %v76
    %110 = vmatpush.xpose.msra.mxu0 %v74
    %111 = vmatpush.xpose.msra.mxu0 %v72
    %112 = vmatpush.xpose.msra.mxu0 %v70
    %113 = vmatpush.xpose.msra.mxu0 %v68
    %114 = vmatpush.xpose.msra.mxu0 %v66
    %115 = vmatpush.xpose.msra.mxu0 %v64
    %116 = vmatpush.xpose.msra.mxu0 %v62
    %117 = vmatpush.xpose.msra.mxu0 %v60
    %118 = vmatpush.xpose.msra.mxu0 %v58
    %119 = vmatpush.xpose.msra.mxu0 %v56
    %120 = vmatpush.xpose.msra.mxu0 %v54
    %121 = vmatmul.f32.gmra.mxu0 %v52
    %v122 = vpop.f32.mrf.mxu0
    %v123 = vadd.f32 %v103, %v122
    %124 = vdwg.mxu0
    %v125 = vadd.f32 %v50, %v123
    %126 = vst [vmem:[#allocation2] sm:$0xff] %v125
    // Predicated region
    $region26: #{tpu_custom_call.1} parent=1 // pred_check
      %p127 = pneg %p45
    $region27: #{tpu_custom_call.1} parent=1 // pred_check_branch
      %129 = sbr.rel (%p127) target = $region29
    $region28: #{tpu_custom_call.1} parent=1 // pred_region
      %v130 = vld [vmem:[#allocation2] sm:$0xff]
      %v131 = vld [vmem:[%s2] sm:$0x1]
      %v133 = vperm.slane %v131, 0
      %v135 = vadd.f32 %v130, %v133
      %v136 = vmax.f32 %v135, 0.0
      %137 = vst [vmem:[#allocation8] sm:$0xff] %v136
    $region29: #{tpu_custom_call.1} parent=1 // pred_fallthru
      _
    // Predicated region
    $region30: #{tpu_custom_call.1} parent=1 // pred_check
      _
    $region31: #{tpu_custom_call.1} parent=1 // pred_check_branch
      %139 = sbr.rel (0) target = $region33
    $region32: #{tpu_custom_call.1} parent=1 // pred_region
      %141 = vsyncadd [#allocation5], 0
      %s143 = sshll.u32 [#allocation8], 4
      %s144 = int_to_ptr.vmem [resolvable:$true] %s143
      %s145 = sshll.u32 %s3, 4
      %s146 = int_to_ptr.hbm [resolvable:$true] %s145
      %148 = dma.vmem_to_hbm [thread:$0]  %s144, 128, %s146, [#allocation5]
    $region33: #{tpu_custom_call.1} parent=1 // pred_fallthru
      _
    // Predicated region
    $region34: #{tpu_custom_call.1} parent=1 // pred_check
      _
    $region35: #{tpu_custom_call.1} parent=1 // pred_check_branch
      %150 = sbr.rel (0) target = $region37
    $region36: #{tpu_custom_call.1} parent=1 // pred_region
      %152 = dma.done [#allocation5], 128
    $region37: #{tpu_custom_call.1} parent=1 // pred_fallthru
      _
    %153 = vsyncpa [#allocation4], 1
    %154 = vsyncpa [#allocation7], 1
    %155 = vsyncpa [#allocation5], 1

</llo_original>
